<compile_context>
chip_gen: v7x
topology: tpu7x:2x2x1
jax: 0.10.0
libtpu: 0.0.40
codegen_flags: <defaults>
</compile_context>

<pallas_src>
import jax
import jax.numpy as jnp
from jax.experimental import pallas as pl
from jax.experimental.pallas import tpu as pltpu

OUTPUT = 2            # module's final out_features
OUT_PAD = 128         # lane-dense padded output width (sliced back to OUTPUT outside)
N_TILE = 8            # batch tile (f32/bf16 sublane multiple); raise for real batches
_LANE = 128


def _round_up(x, m):
    return (x + m - 1) // m * m


def _pick_k_tile(k_total, n_tile, h1, itemsize=2, vmem_budget_bytes=8 << 20):
    """Largest K tile (multiple of 128) whose double-buffered x / W1 tiles fit a
    conservative VMEM budget.  8 MiB stays under every generation's scoped-VMEM
    default (16 MiB v5e, 32 MiB v6e/v7x) without touching vmem_limit_bytes."""
    per_k = 2 * (n_tile + h1) * itemsize          # 2x: BlockSpec double-buffering
    tk = max(_LANE, (vmem_budget_bytes // per_k) // _LANE * _LANE)
    return int(min(tk, _round_up(k_total, _LANE)))


def mlp_kernel(x_ref, w1_ref, b1_ref, w2_ref, b2_ref, w3_ref, b3_ref,
               o_ref, acc_ref):
    """grid = (batch tiles, K tiles).  Layer-1 partial products accumulate over
    the K axis into an f32 VMEM scratch; bias+ReLU and the small layer-2/3
    matmuls run as a fused epilogue on the last K step."""
    k = pl.program_id(1)

    @pl.when(k == 0)
    def _init():
        acc_ref[...] = jnp.zeros_like(acc_ref)

    # Layer-1 partial product for this K slab (bf16 operands, f32 MXU accumulation).
    acc_ref[...] += jnp.dot(x_ref[...], w1_ref[...],
                            preferred_element_type=jnp.float32)

    @pl.when(k == pl.num_programs(1) - 1)
    def _epilogue():
        h1 = jnp.maximum(acc_ref[...] + b1_ref[...], 0.0)
        h2 = jnp.dot(h1.astype(w2_ref.dtype), w2_ref[...],
                     preferred_element_type=jnp.float32) + b2_ref[...]
        h2 = jnp.maximum(h2, 0.0)
        y = jnp.dot(h2.astype(w3_ref.dtype), w3_ref[...],
                    preferred_element_type=jnp.float32) + b3_ref[...]
        o_ref[...] = y.astype(o_ref.dtype)


def prepare_params(params, *, n_tile=N_TILE, k_tile=None,
                   compute_dtype=jnp.bfloat16):
    """One-time parameter preparation (NOT on the per-call forward path):
      * PyTorch (out,in) weights -> (in,out) so the kernel computes x @ W,
      * cast matmul operands to bf16 (accumulation stays f32 in-kernel),
      * zero-pad K to a multiple of the K tile and the output to lane-dense 128.
    Zero padding preserves the math exactly (padded rows/cols contribute 0)."""
    (w1, b1), (w2, b2), (w3, b3) = params
    h1, k_in = w1.shape
    h2 = w2.shape[0]
    out_f = w3.shape[0]
    assert out_f <= OUT_PAD

    if k_tile is None:
        k_tile = _pick_k_tile(k_in, n_tile, h1)
    k_pad = _round_up(k_in, k_tile)

    w1t = jnp.zeros((k_pad, h1), compute_dtype).at[:k_in, :].set(
        w1.T.astype(compute_dtype))
    w2t = w2.T.astype(compute_dtype)
    w3t = jnp.zeros((h2, OUT_PAD), compute_dtype).at[:, :out_f].set(
        w3.T.astype(compute_dtype))
    b1r = b1.reshape(1, h1).astype(jnp.float32)
    b2r = b2.reshape(1, h2).astype(jnp.float32)
    b3r = jnp.zeros((1, OUT_PAD), jnp.float32).at[:, :out_f].set(
        b3.astype(jnp.float32))

    return dict(w1=w1t, b1=b1r, w2=w2t, b2=b2r, w3=w3t, b3=b3r,
                k_in=int(k_in), k_pad=int(k_pad), k_tile=int(k_tile),
                n_tile=int(n_tile), h1=int(h1), h2=int(h2),
                out_features=int(out_f), compute_dtype=compute_dtype)


def mlp_forward(x, prep):
    """x: (N, C, H, W) float32.  Returns (N, OUTPUT) float32."""
    n = x.shape[0]
    n_tile, k_tile, k_pad = prep["n_tile"], prep["k_tile"], prep["k_pad"]
    h1, h2, out_f = prep["h1"], prep["h2"], prep["out_features"]
    dt = prep["compute_dtype"]

    # nn.Flatten() + batch/K zero padding (zero K columns hit zero W1 rows -> no-op).
    x_flat = x.reshape(n, -1).astype(dt)
    assert x_flat.shape[1] == prep["k_in"], "input feature count mismatch vs params"
    n_pad = _round_up(n, n_tile)
    x_p = jnp.zeros((n_pad, k_pad), dt).at[:n, :x_flat.shape[1]].set(x_flat)

    grid = (n_pad // n_tile, k_pad // k_tile)
    inputs = (x_p, prep["w1"], prep["b1"], prep["w2"], prep["b2"],
              prep["w3"], prep["b3"])

    flops = 2 * n_pad * (k_pad * h1 + h1 * h2 + h2 * OUT_PAD)
    bytes_accessed = int(sum(int(a.size) * a.dtype.itemsize for a in inputs)
                         + n_pad * OUT_PAD * 4)

    out = pl.pallas_call(
        mlp_kernel,
        out_shape=jax.ShapeDtypeStruct((n_pad, OUT_PAD), jnp.float32),
        grid=grid,
        in_specs=[
            pl.BlockSpec((n_tile, k_tile), lambda i, k: (i, k)),   # x tile
            pl.BlockSpec((k_tile, h1), lambda i, k: (k, 0)),       # W1 K-slab
            pl.BlockSpec((1, h1), lambda i, k: (0, 0)),            # b1
            pl.BlockSpec((h1, h2), lambda i, k: (0, 0)),           # W2 (VMEM-resident)
            pl.BlockSpec((1, h2), lambda i, k: (0, 0)),            # b2
            pl.BlockSpec((h2, OUT_PAD), lambda i, k: (0, 0)),      # W3 (padded, resident)
            pl.BlockSpec((1, OUT_PAD), lambda i, k: (0, 0)),       # b3 (padded)
        ],
        out_specs=pl.BlockSpec((n_tile, OUT_PAD), lambda i, k: (i, 0)),
        scratch_shapes=[pltpu.VMEM((n_tile, h1), jnp.float32)],
        compiler_params=pltpu.CompilerParams(
            dimension_semantics=("parallel", "arbitrary")),
        cost_estimate=pl.CostEstimate(flops=flops, transcendentals=0,
                                      bytes_accessed=bytes_accessed),
    )(*inputs)

    return out[:n, :out_f]


def init_linear(kw, kb, fan_in, fan_out):
    # Deterministic init mimicking PyTorch nn.Linear default (U(+/- 1/sqrt(fan_in))).
    bound = 1.0 / (fan_in ** 0.5)
    w = jax.random.uniform(kw, (fan_out, fan_in), jnp.float32, -bound, bound)
    b = jax.random.uniform(kb, (fan_out,), jnp.float32, -bound, bound)
    return w, b


if __name__ == "__main__":
    # Small shapes consistent with the module (real model uses 3x640x480 inputs;
    # the K-tiled structure here is exactly what scales to that size).
    N, C, H, W = 8, 3, 32, 32
    in_features = C * H * W          # 3072
    H1, H2 = 128, 64                 # trial: n_layers=2, n_units_l0=128, n_units_l1=64

    key = jax.random.PRNGKey(0)
    k = jax.random.split(key, 7)
    p1 = init_linear(k[0], k[1], in_features, H1)
    p2 = init_linear(k[2], k[3], H1, H2)
    p3 = init_linear(k[4], k[5], H2, OUTPUT)
    x = jax.random.normal(k[6], (N, C, H, W), jnp.float32)

    # k_tile=512 forces several K steps at this small demo size so the accumulator
    # path is exercised; at real shapes leave k_tile=None (auto-sized vs VMEM).
    prep = prepare_params((p1, p2, p3), k_tile=512)

    y = mlp_forward(x, prep)
    jax.block_until_ready(y)
    assert y.shape == (N, OUTPUT)

    # (a) bf16-weight reference (same numerics path as the kernel) — tight check.
    bf = jnp.bfloat16
    xf = x.reshape(N, -1)
    h = jnp.maximum(jnp.dot(xf.astype(bf), p1[0].T.astype(bf),
                            preferred_element_type=jnp.float32) + p1[1], 0.0)
    h = jnp.maximum(jnp.dot(h.astype(bf), p2[0].T.astype(bf),
                            preferred_element_type=jnp.float32) + p2[1], 0.0)
    ref_bf16 = jnp.dot(h.astype(bf), p3[0].T.astype(bf),
                       preferred_element_type=jnp.float32) + p3[1]

    # (b) full-f32 reference (exact PyTorch-module semantics) — loose check.
    rf = jnp.maximum(xf @ p1[0].T + p1[1], 0.0)
    rf = jnp.maximum(rf @ p2[0].T + p2[1], 0.0)
    ref_f32 = rf @ p3[0].T + p3[1]

    assert jnp.allclose(y, ref_bf16, atol=1e-2, rtol=1e-2), "mismatch vs bf16 reference"
    assert jnp.allclose(y, ref_f32, atol=5e-2, rtol=5e-2), "mismatch vs f32 reference"

    print("KERNEL_OK")
</pallas_src>

<mosaic_0001>
module attributes {stable_mosaic.version = 11 : i64} {
  func.func @mlp_kernel(%arg0: i32, %arg1: i32, %arg2: memref<8x512xbf16, #tpu.memory_space<vmem>>, %arg3: memref<512x128xbf16, #tpu.memory_space<vmem>>, %arg4: memref<1x128xf32, #tpu.memory_space<vmem>>, %arg5: memref<128x64xbf16, #tpu.memory_space<vmem>>, %arg6: memref<1x64xf32, #tpu.memory_space<vmem>>, %arg7: memref<64x128xbf16, #tpu.memory_space<vmem>>, %arg8: memref<1x128xf32, #tpu.memory_space<vmem>>, %arg9: memref<8x128xf32, #tpu.memory_space<vmem>>, %arg10: memref<8x128xf32, #tpu.memory_space<vmem>>) attributes {dimension_semantics = [#tpu.dimension_semantics<parallel>, #tpu.dimension_semantics<arbitrary>], iteration_bounds = array<i64: 1, 6>, scalar_prefetch = 0 : i64, scratch_operands = 1 : i64, tpu.core_type = #tpu.core_type<tc>, window_params = [{transform_indices = @transform_0, window_bounds = array<i64: 8, 512>}, {transform_indices = @transform_1, window_bounds = array<i64: 512, 128>}, {pipeline_mode = #tpu.pipeline_mode<synchronous>, transform_indices = @transform_2, window_bounds = array<i64: 1, 128>}, {pipeline_mode = #tpu.pipeline_mode<synchronous>, transform_indices = @transform_3, window_bounds = array<i64: 128, 64>}, {pipeline_mode = #tpu.pipeline_mode<synchronous>, transform_indices = @transform_4, window_bounds = array<i64: 1, 64>}, {pipeline_mode = #tpu.pipeline_mode<synchronous>, transform_indices = @transform_5, window_bounds = array<i64: 64, 128>}, {pipeline_mode = #tpu.pipeline_mode<synchronous>, transform_indices = @transform_6, window_bounds = array<i64: 1, 128>}, {transform_indices = @transform_7, window_bounds = array<i64: 8, 128>}]} {
    %c0_i32 = arith.constant 0 : i32
    %0 = arith.cmpi eq, %arg1, %c0_i32 : i32
    %1 = arith.extui %0 : i1 to i32
    %c0_i32_0 = arith.constant 0 : i32
    %2 = arith.cmpi ne, %1, %c0_i32_0 : i32
    scf.if %2 {
      %cst_9 = arith.constant 0.000000e+00 : f32
      %12 = vector.broadcast %cst_9 : f32 to vector<8x128xf32>
      %c0_10 = arith.constant 0 : index
      %c0_11 = arith.constant 0 : index
      %13 = vector.load %arg10[%c0_10, %c0_11] : memref<8x128xf32, #tpu.memory_space<vmem>>, vector<8x128xf32>
      tpu.vector_store %arg10[%c0_10, %c0_11], %12 {strides = array<i32>} : memref<8x128xf32, #tpu.memory_space<vmem>>, vector<8x128xf32>,
    } else {
    }
    %c0 = arith.constant 0 : index
    %c0_1 = arith.constant 0 : index
    %3 = vector.load %arg10[%c0, %c0_1] : memref<8x128xf32, #tpu.memory_space<vmem>>, vector<8x128xf32>
    %c0_2 = arith.constant 0 : index
    %c0_3 = arith.constant 0 : index
    %4 = vector.load %arg2[%c0_2, %c0_3] : memref<8x512xbf16, #tpu.memory_space<vmem>>, vector<8x512xbf16>
    %c0_4 = arith.constant 0 : index
    %c0_5 = arith.constant 0 : index
    %5 = vector.load %arg3[%c0_4, %c0_5] : memref<512x128xbf16, #tpu.memory_space<vmem>>, vector<512x128xbf16>
    %cst = arith.constant dense<0.000000e+00> : vector<8x128xf32>
    %6 = tpu.matmul %4, %5, %cst {dimension_numbers = #tpu.dot_dimension_numbers<[1], [0], [0], [1], [0, 0, 1, 1], [], []>} : vector<8x512xbf16>, vector<512x128xbf16>, vector<8x128xf32> -> vector<8x128xf32>
    %7 = arith.addf %3, %6 : vector<8x128xf32>
    %c0_6 = arith.constant 0 : index
    %c0_7 = arith.constant 0 : index
    %8 = vector.load %arg10[%c0_6, %c0_7] : memref<8x128xf32, #tpu.memory_space<vmem>>, vector<8x128xf32>
    tpu.vector_store %arg10[%c0_6, %c0_7], %7 {strides = array<i32>} : memref<8x128xf32, #tpu.memory_space<vmem>>, vector<8x128xf32>,
    %c5_i32 = arith.constant 5 : i32
    %9 = arith.cmpi eq, %arg1, %c5_i32 : i32
    %10 = arith.extui %9 : i1 to i32
    %c0_i32_8 = arith.constant 0 : i32
    %11 = arith.cmpi ne, %10, %c0_i32_8 : i32
    scf.if %11 {
      %c0_9 = arith.constant 0 : index
      %c0_10 = arith.constant 0 : index
      %12 = vector.load %arg10[%c0_9, %c0_10] : memref<8x128xf32, #tpu.memory_space<vmem>>, vector<8x128xf32>
      %c0_11 = arith.constant 0 : index
      %c0_12 = arith.constant 0 : index
      %13 = vector.load %arg4[%c0_11, %c0_12] : memref<1x128xf32, #tpu.memory_space<vmem>>, vector<1x128xf32>
      %14 = vector.broadcast %13 : vector<1x128xf32> to vector<8x128xf32>
      %15 = arith.addf %12, %14 : vector<8x128xf32>
      %cst_13 = arith.constant 0.000000e+00 : f32
      %16 = vector.broadcast %cst_13 : f32 to vector<8x128xf32>
      %17 = arith.maximumf %15, %16 : vector<8x128xf32>
      %18 = arith.truncf %17 : vector<8x128xf32> to vector<8x128xbf16>
      %c0_14 = arith.constant 0 : index
      %c0_15 = arith.constant 0 : index
      %19 = vector.load %arg5[%c0_14, %c0_15] : memref<128x64xbf16, #tpu.memory_space<vmem>>, vector<128x64xbf16>
      %cst_16 = arith.constant dense<0.000000e+00> : vector<8x64xf32>
      %20 = tpu.matmul %18, %19, %cst_16 {dimension_numbers = #tpu.dot_dimension_numbers<[1], [0], [0], [1], [0, 0, 1, 1], [], []>} : vector<8x128xbf16>, vector<128x64xbf16>, vector<8x64xf32> -> vector<8x64xf32>
      %c0_17 = arith.constant 0 : index
      %c0_18 = arith.constant 0 : index
      %21 = vector.load %arg6[%c0_17, %c0_18] : memref<1x64xf32, #tpu.memory_space<vmem>>, vector<1x64xf32>
      %22 = vector.broadcast %21 : vector<1x64xf32> to vector<8x64xf32>
      %23 = arith.addf %20, %22 : vector<8x64xf32>
      %cst_19 = arith.constant 0.000000e+00 : f32
      %24 = vector.broadcast %cst_19 : f32 to vector<8x64xf32>
      %25 = arith.maximumf %23, %24 : vector<8x64xf32>
      %26 = arith.truncf %25 : vector<8x64xf32> to vector<8x64xbf16>
      %c0_20 = arith.constant 0 : index
      %c0_21 = arith.constant 0 : index
      %27 = vector.load %arg7[%c0_20, %c0_21] : memref<64x128xbf16, #tpu.memory_space<vmem>>, vector<64x128xbf16>
      %cst_22 = arith.constant dense<0.000000e+00> : vector<8x128xf32>
      %28 = tpu.matmul %26, %27, %cst_22 {dimension_numbers = #tpu.dot_dimension_numbers<[1], [0], [0], [1], [0, 0, 1, 1], [], []>} : vector<8x64xbf16>, vector<64x128xbf16>, vector<8x128xf32> -> vector<8x128xf32>
      %c0_23 = arith.constant 0 : index
      %c0_24 = arith.constant 0 : index
      %29 = vector.load %arg8[%c0_23, %c0_24] : memref<1x128xf32, #tpu.memory_space<vmem>>, vector<1x128xf32>
      %30 = vector.broadcast %29 : vector<1x128xf32> to vector<8x128xf32>
      %31 = arith.addf %28, %30 : vector<8x128xf32>
      %c0_25 = arith.constant 0 : index
      %c0_26 = arith.constant 0 : index
      %32 = vector.load %arg9[%c0_25, %c0_26] : memref<8x128xf32, #tpu.memory_space<vmem>>, vector<8x128xf32>
      tpu.vector_store %arg9[%c0_25, %c0_26], %31 {strides = array<i32>} : memref<8x128xf32, #tpu.memory_space<vmem>>, vector<8x128xf32>,
    } else {
    }
    return
  }
  func.func @transform_0(%arg0: i32, %arg1: i32) -> (i32, i32) {
    %c0_i32 = arith.constant 0 : i32
    return %arg0, %arg1 : i32, i32
  }
  func.func @transform_1(%arg0: i32, %arg1: i32) -> (i32, i32) {
    %c0_i32 = arith.constant 0 : i32
    %c0_i32_0 = arith.constant 0 : i32
    return %arg1, %c0_i32 : i32, i32
  }
  func.func @transform_2(%arg0: i32, %arg1: i32) -> (i32, i32) {
    %c0_i32 = arith.constant 0 : i32
    %c0_i32_0 = arith.constant 0 : i32
    %c0_i32_1 = arith.constant 0 : i32
    return %c0_i32, %c0_i32_0 : i32, i32
  }
  func.func @transform_3(%arg0: i32, %arg1: i32) -> (i32, i32) {
    %c0_i32 = arith.constant 0 : i32
    %c0_i32_0 = arith.constant 0 : i32
    %c0_i32_1 = arith.constant 0 : i32
    return %c0_i32, %c0_i32_0 : i32, i32
  }
  func.func @transform_4(%arg0: i32, %arg1: i32) -> (i32, i32) {
    %c0_i32 = arith.constant 0 : i32
    %c0_i32_0 = arith.constant 0 : i32
    %c0_i32_1 = arith.constant 0 : i32
    return %c0_i32, %c0_i32_0 : i32, i32
  }
  func.func @transform_5(%arg0: i32, %arg1: i32) -> (i32, i32) {
    %c0_i32 = arith.constant 0 : i32
    %c0_i32_0 = arith.constant 0 : i32
    %c0_i32_1 = arith.constant 0 : i32
    return %c0_i32, %c0_i32_0 : i32, i32
  }
  func.func @transform_6(%arg0: i32, %arg1: i32) -> (i32, i32) {
    %c0_i32 = arith.constant 0 : i32
    %c0_i32_0 = arith.constant 0 : i32
    %c0_i32_1 = arith.constant 0 : i32
    return %c0_i32, %c0_i32_0 : i32, i32
  }
  func.func @transform_7(%arg0: i32, %arg1: i32) -> (i32, i32) {
    %c0_i32 = arith.constant 0 : i32
    %c0_i32_0 = arith.constant 0 : i32
    return %arg0, %c0_i32 : i32, i32
  }
}

</mosaic_0001>

<llo_original>
// kernel: tpu_custom_call.1
$region0: #{tpu_custom_call.1}
  #allocation0 [shape = 'u32[]', space=smem, size = 0x4, offset = 0x4, fixed_abs, tag = 'smem constant byte address 0x4 - core index']
  #allocation1 [shape = 'u32[144,128]{1,0:T(1,128)}', space=vmem, size = 0x12000, scoped, tag = 'internal scratch']
  #allocation2 [shape = 'f32[8,128]{1,0:T(8,128)}', space=vmem, size = 0x1000, scoped, tag = 'scratch operand']
  %s0 = inlined_call_operand.vmem [shape: bf16[8,3072], index: 0, kind: input, shape index: {}]
  %s1 = inlined_call_operand.hbm [shape: bf16[3072,128], index: 1, kind: input, shape index: {}]
  %s2 = inlined_call_operand.vmem [shape: f32[1,128], index: 2, kind: input, shape index: {}]
  %s3 = inlined_call_operand.vmem [shape: bf16[128,64], index: 3, kind: input, shape index: {}]
  %s4 = inlined_call_operand.vmem [shape: f32[1,64], index: 4, kind: input, shape index: {}]
  %s5 = inlined_call_operand.hbm [shape: bf16[64,128], index: 5, kind: input, shape index: {}]
  %s6 = inlined_call_operand.vmem [shape: f32[1,128], index: 6, kind: input, shape index: {}]
  %s7 = inlined_call_operand.hbm [shape: f32[8,128], index: 7, kind: output, shape index: {}]
  %s8 = sld [smem:[#allocation0]]
  $region77: #{tpu_custom_call.1} parent=0
    _
  %s10 = ssub.s32 1, %s8
  %s11 = scalar_select 0, %s10, %s8
  $region1: #{tpu_custom_call.1} parent=0
    #allocation3 [shape = 'u8[262144]{0}', space=vmem, size = 0x40000, scoped, tag = 'input window, operand 1']
    #allocation4 [shape = 's32[2]{0}', space=sflag, size = 0x8, scoped, tag = 'scoped memory for tpu_custom_call.1']
    #allocation5 [shape = 's32[2]{0}', space=sflag, size = 0x8, scoped, tag = 'scoped memory for tpu_custom_call.1']
    #allocation6 [shape = 'u8[16384]{0}', space=vmem, size = 0x4000, scoped, tag = 'input window, operand 5, single buffered']
    #allocation7 [shape = 's32[1]{0}', space=sflag, size = 0x4, scoped, tag = 'scoped memory for tpu_custom_call.1']
    #allocation8 [shape = 'u8[4096]{0}', space=vmem, size = 0x1000, scoped, tag = 'output window, operand 0, single buffered']
    %12 = vsyncpa [#allocation4], 0
    %s13 = scalar_lea.sflag [#allocation4], 1
    %14 = vsyncpa %s13, 0
    %15 = vsyncpa [#allocation7], 0
    %16 = vsyncpa [#allocation5], 0
    loop: start=0, step=1, limit=8
    $region2: #{tpu_custom_call.1} parent=1 // loop_pre_header
      _
    $region3: #{tpu_custom_call.1} parent=1 // loop_header
      %s18 = sphi 0, %s22
      %p19 = scmp.ge.s32.totalorder %s18, 8
      %s25 = sphi 0, %s37
      %s26 = sphi 0, %s33
      %s27 = sphi 0, %s25
      %s28 = sphi 0, %s26
      %s29 = sphi 0, %s27
      %s30 = sphi 0, %s28
      %s42 = sphi 0, %s44
      %s45 = sphi 0, %s42
      %s46 = sphi 0, %s45
      %s62 = sphi 0, %s46
      %s68 = sphi 0, %s70
      %s71 = sphi 0, %s68
      %s72 = sphi 0, %s71
      %s88 = sphi 0, %s72
      %s92 = sphi 0, %s92
      %s94 = sphi 0, %s92
      %s95 = sphi 0, %s94
      %s109 = sphi 0, %s95
      %s113 = sphi 0, %s113
      %s115 = sphi 0, %s113
      %s116 = sphi 0, %s115
      %s130 = sphi 0, %s116
      %s134 = sphi 0, %s134
      %s136 = sphi 0, %s134
      %s137 = sphi 0, %s136
      %s151 = sphi 0, %s137
      %s155 = sphi 0, %s155
      %s157 = sphi 0, %s155
      %s158 = sphi 0, %s157
      %s172 = sphi 0, %s158
      %s176 = sphi 0, %s176
      %s178 = sphi 0, %s176
      %s179 = sphi 0, %s178
      %s193 = sphi 0, %s179
      %s199 = sphi 0, %s201
      %s202 = sphi 0, %s199
      %s203 = sphi 0, %s202
      %s219 = sphi 0, %s203
    $region4: #{tpu_custom_call.1} parent=1 // loop_header_branch
      %21 = sbr.rel (%p19) target = $region8
    $region5: #{tpu_custom_call.1} parent=1 // loop_body
      %s23 = ssub.s32 %s18, 1
      %s24 = ssub.s32 %s18, 2
      %s31 = sadd.s32 1, %s26
      %p32 = scmp.ge.s32.totalorder %s31, 6
      %s33 = scalar_select %p32, 0, %s31
      %s34 = sadd.s32 1, %s25
      %s35 = scalar_select %p32, %s34, %s25
      %p36 = scmp.ge.s32.totalorder %s35, 1
      %s37 = scalar_select %p36, 0, %s35
      %s38 = ssub.s32 %s25, %s37
      %s39 = ssub.s32 %s26, %s33
      %s40 = sor.u32 %s38, %s39
      %p41 = scmp.eq.s32.totalorder %s40, 0
      %s43 = sadd.s32 %s42, 1
      %s44 = scalar_select %p41, %s42, %s43
      %p47 = pneg %p41
      %p48 = scmp.eq.s32.totalorder %s18, 5
      %p49 = por %p47, %p48
      %p50 = scmp.ne.s32.totalorder %s42, %s45
      %p51 = scmp.eq.s32.totalorder %s18, 0
      %p52 = por %p50, %p51
      %p53 = scmp.ne.s32.totalorder %s42, %s45
      %p54 = scmp.eq.s32.totalorder %s23, 5
      %p55 = por %p53, %p54
      %p56 = scmp.ne.s32.totalorder %s45, %s46
      %p57 = scmp.eq.s32.totalorder %s23, 0
      %p58 = por %p56, %p57
      %p59 = scmp.ne.s32.totalorder %s45, %s46
      %p60 = scmp.eq.s32.totalorder %s24, 5
      %p61 = por %p59, %p60
      %p63 = scmp.ne.s32.totalorder %s46, %s62
      %p64 = scmp.eq.s32.totalorder %s24, 0
      %p65 = por %p63, %p64
      %s66 = ssub.s32 %s26, %s33
      %p67 = scmp.eq.s32.totalorder %s66, 0
      %s69 = sadd.s32 %s68, 1
      %s70 = scalar_select %p67, %s68, %s69
      %p73 = pneg %p67
      %p74 = scmp.eq.s32.totalorder %s18, 5
      %p75 = por %p73, %p74
      %p76 = scmp.ne.s32.totalorder %s68, %s71
      %p77 = scmp.eq.s32.totalorder %s18, 0
      %p78 = por %p76, %p77
      %p79 = scmp.ne.s32.totalorder %s68, %s71
      %p80 = scmp.eq.s32.totalorder %s23, 5
      %p81 = por %p79, %p80
      %p82 = scmp.ne.s32.totalorder %s71, %s72
      %p83 = scmp.eq.s32.totalorder %s23, 0
      %p84 = por %p82, %p83
      %p85 = scmp.ne.s32.totalorder %s71, %s72
      %p86 = scmp.eq.s32.totalorder %s24, 5
      %p87 = por %p85, %p86
      %p89 = scmp.ne.s32.totalorder %s72, %s88
      %p90 = scmp.eq.s32.totalorder %s24, 0
      %p91 = por %p89, %p90
      %s93 = sadd.s32 %s92, 1
      %p96 = scmp.eq.s32.totalorder %s18, 5
      %p97 = scmp.ne.s32.totalorder %s92, %s94
      %p98 = scmp.eq.s32.totalorder %s18, 0
      %p99 = por %p97, %p98
      %p100 = scmp.ne.s32.totalorder %s92, %s94
      %p101 = scmp.eq.s32.totalorder %s23, 5
      %p102 = por %p100, %p101
      %p103 = scmp.ne.s32.totalorder %s94, %s95
      %p104 = scmp.eq.s32.totalorder %s23, 0
      %p105 = por %p103, %p104
      %p106 = scmp.ne.s32.totalorder %s94, %s95
      %p107 = scmp.eq.s32.totalorder %s24, 5
      %p108 = por %p106, %p107
      %p110 = scmp.ne.s32.totalorder %s95, %s109
      %p111 = scmp.eq.s32.totalorder %s24, 0
      %p112 = por %p110, %p111
      %s114 = sadd.s32 %s113, 1
      %p117 = scmp.eq.s32.totalorder %s18, 5
      %p118 = scmp.ne.s32.totalorder %s113, %s115
      %p119 = scmp.eq.s32.totalorder %s18, 0
      %p120 = por %p118, %p119
      %p121 = scmp.ne.s32.totalorder %s113, %s115
      %p122 = scmp.eq.s32.totalorder %s23, 5
      %p123 = por %p121, %p122
      %p124 = scmp.ne.s32.totalorder %s115, %s116
      %p125 = scmp.eq.s32.totalorder %s23, 0
      %p126 = por %p124, %p125
      %p127 = scmp.ne.s32.totalorder %s115, %s116
      %p128 = scmp.eq.s32.totalorder %s24, 5
      %p129 = por %p127, %p128
      %p131 = scmp.ne.s32.totalorder %s116, %s130
      %p132 = scmp.eq.s32.totalorder %s24, 0
      %p133 = por %p131, %p132
      %s135 = sadd.s32 %s134, 1
      %p138 = scmp.eq.s32.totalorder %s18, 5
      %p139 = scmp.ne.s32.totalorder %s134, %s136
      %p140 = scmp.eq.s32.totalorder %s18, 0
      %p141 = por %p139, %p140
      %p142 = scmp.ne.s32.totalorder %s134, %s136
      %p143 = scmp.eq.s32.totalorder %s23, 5
      %p144 = por %p142, %p143
      %p145 = scmp.ne.s32.totalorder %s136, %s137
      %p146 = scmp.eq.s32.totalorder %s23, 0
      %p147 = por %p145, %p146
      %p148 = scmp.ne.s32.totalorder %s136, %s137
      %p149 = scmp.eq.s32.totalorder %s24, 5
      %p150 = por %p148, %p149
      %p152 = scmp.ne.s32.totalorder %s137, %s151
      %p153 = scmp.eq.s32.totalorder %s24, 0
      %p154 = por %p152, %p153
      %s156 = sadd.s32 %s155, 1
      %p159 = scmp.eq.s32.totalorder %s18, 5
      %p160 = scmp.ne.s32.totalorder %s155, %s157
      %p161 = scmp.eq.s32.totalorder %s18, 0
      %p162 = por %p160, %p161
      %p163 = scmp.ne.s32.totalorder %s155, %s157
      %p164 = scmp.eq.s32.totalorder %s23, 5
      %p165 = por %p163, %p164
      %p166 = scmp.ne.s32.totalorder %s157, %s158
      %p167 = scmp.eq.s32.totalorder %s23, 0
      %p168 = por %p166, %p167
      %p169 = scmp.ne.s32.totalorder %s157, %s158
      %p170 = scmp.eq.s32.totalorder %s24, 5
      %p171 = por %p169, %p170
      %p173 = scmp.ne.s32.totalorder %s158, %s172
      %p174 = scmp.eq.s32.totalorder %s24, 0
      %p175 = por %p173, %p174
      %s177 = sadd.s32 %s176, 1
      %p180 = scmp.eq.s32.totalorder %s18, 5
      %p181 = scmp.ne.s32.totalorder %s176, %s178
      %p182 = scmp.eq.s32.totalorder %s18, 0
      %p183 = por %p181, %p182
      %p184 = scmp.ne.s32.totalorder %s176, %s178
      %p185 = scmp.eq.s32.totalorder %s23, 5
      %p186 = por %p184, %p185
      %p187 = scmp.ne.s32.totalorder %s178, %s179
      %p188 = scmp.eq.s32.totalorder %s23, 0
      %p189 = por %p187, %p188
      %p190 = scmp.ne.s32.totalorder %s178, %s179
      %p191 = scmp.eq.s32.totalorder %s24, 5
      %p192 = por %p190, %p191
      %p194 = scmp.ne.s32.totalorder %s179, %s193
      %p195 = scmp.eq.s32.totalorder %s24, 0
      %p196 = por %p194, %p195
      %s197 = ssub.s32 %s25, %s37
      %p198 = scmp.eq.s32.totalorder %s197, 0
      %s200 = sadd.s32 %s199, 1
      %s201 = scalar_select %p198, %s199, %s200
      %p204 = pneg %p198
      %p205 = scmp.eq.s32.totalorder %s18, 5
      %p206 = por %p204, %p205
      %p207 = scmp.ne.s32.totalorder %s199, %s202
      %p208 = scmp.eq.s32.totalorder %s18, 0
      %p209 = por %p207, %p208
      %p210 = scmp.ne.s32.totalorder %s199, %s202
      %p211 = scmp.eq.s32.totalorder %s23, 5
      %p212 = por %p210, %p211
      %p213 = scmp.ne.s32.totalorder %s202, %s203
      %p214 = scmp.eq.s32.totalorder %s23, 0
      %p215 = por %p213, %p214
      %p216 = scmp.ne.s32.totalorder %s202, %s203
      %p217 = scmp.eq.s32.totalorder %s24, 5
      %p218 = por %p216, %p217
      %p220 = scmp.ne.s32.totalorder %s203, %s219
      %p221 = scmp.eq.s32.totalorder %s24, 0
      %p222 = por %p220, %p221
      %p223 = scmp.le.s32.totalorder 1, %s18
      %p224 = scmp.lt.s32.totalorder %s18, 7
      %p225 = pnand %p223, %p224
      %p226 = pneg %p225
      // Predicated region
      $region9: #{tpu_custom_call.1} parent=5 // pred_check
        _
      $region10: #{tpu_custom_call.1} parent=5 // pred_check_branch
        %228 = sbr.rel (%p225) target = $region12
      $region11: #{tpu_custom_call.1} parent=5 // pred_region
        %s229 = ssub.s32 %s18, 1
        // Predicated region
        $region13: #{tpu_custom_call.1} parent=11 // pred_check
          %p230 = pneg %p105
        $region14: #{tpu_custom_call.1} parent=11 // pred_check_branch
          %232 = sbr.rel (%p230) target = $region16
        $region15: #{tpu_custom_call.1} parent=11 // pred_region
          _
        $region16: #{tpu_custom_call.1} parent=11 // pred_fallthru
          _
        // Predicated region
        $region17: #{tpu_custom_call.1} parent=11 // pred_check
          %p233 = pneg %p126
        $region18: #{tpu_custom_call.1} parent=11 // pred_check_branch
          %235 = sbr.rel (%p233) target = $region20
        $region19: #{tpu_custom_call.1} parent=11 // pred_region
          _
        $region20: #{tpu_custom_call.1} parent=11 // pred_fallthru
          _
        // Predicated region
        $region21: #{tpu_custom_call.1} parent=11 // pred_check
          %p236 = pneg %p147
        $region22: #{tpu_custom_call.1} parent=11 // pred_check_branch
          %238 = sbr.rel (%p236) target = $region24
        $region23: #{tpu_custom_call.1} parent=11 // pred_region
          _
        $region24: #{tpu_custom_call.1} parent=11 // pred_fallthru
          _
        // Predicated region
        $region25: #{tpu_custom_call.1} parent=11 // pred_check
          %p239 = pneg %p168
        $region26: #{tpu_custom_call.1} parent=11 // pred_check_branch
          %241 = sbr.rel (%p239) target = $region28
        $region27: #{tpu_custom_call.1} parent=11 // pred_region
          %s243 = ssub.s32 512, 512
          %244 = vsyncadd [#allocation7], %s243
          %s245 = sshll.u32 [#allocation6], 4
          %s246 = int_to_ptr.vmem [resolvable:$true] %s245
          %251 = dma.hbm_to_vmem [thread:$0]  %s5, 512, %s246, [#allocation7], 64, 64, 4
        $region28: #{tpu_custom_call.1} parent=11 // pred_fallthru
          _
        // Predicated region
        $region29: #{tpu_custom_call.1} parent=11 // pred_check
          %p252 = pneg %p189
        $region30: #{tpu_custom_call.1} parent=11 // pred_check_branch
          %254 = sbr.rel (%p252) target = $region32
        $region31: #{tpu_custom_call.1} parent=11 // pred_region
          _
        $region32: #{tpu_custom_call.1} parent=11 // pred_fallthru
          _
      $region12: #{tpu_custom_call.1} parent=5 // pred_fallthru
        _
      %p255 = scmp.lt.s32.totalorder %s18, 6
      // Predicated region
      $region33: #{tpu_custom_call.1} parent=5 // pred_check
        %p256 = pneg %p255
      $region34: #{tpu_custom_call.1} parent=5 // pred_check_branch
        %258 = sbr.rel (%p256) target = $region36
      $region35: #{tpu_custom_call.1} parent=5 // pred_region
        // Predicated region
        $region37: #{tpu_custom_call.1} parent=35 // pred_check
          %p259 = pneg %p52
        $region38: #{tpu_custom_call.1} parent=35 // pred_check_branch
          %261 = sbr.rel (%p259) target = $region40
        $region39: #{tpu_custom_call.1} parent=35 // pred_region
          %s262 = smul.u32 4, %s26
          %p263 = scmp.lt.s32.totalorder %s25, 0
          %s264 = scalar_select %p263, %s25, 0
          %p265 = scmp.lt.s32.totalorder %s262, 23
          %s266 = scalar_select %p265, %s262, 23
          %s267 = smul.addr %s264, 24
          %s268 = sadd.s32 %s266, %s267
          %s269 = smul.addr %s268, 4
          %s270 = scalar_lea.vmem %s0, %s269
          %s271 = smul.u32 4, %s26
        $region40: #{tpu_custom_call.1} parent=35 // pred_fallthru
          _
        // Predicated region
        $region41: #{tpu_custom_call.1} parent=35 // pred_check
          %p272 = pneg %p78
        $region42: #{tpu_custom_call.1} parent=35 // pred_check_branch
          %274 = sbr.rel (%p272) target = $region44
        $region43: #{tpu_custom_call.1} parent=35 // pred_region
          %s275 = sand.u32 %s68, 1
          %s276 = scalar_lea.sflag [#allocation4], %s275
          %s277 = sand.u32 %s68, 1
          %s278 = smul.addr %s277, 256
          %s279 = scalar_lea.vmem [#allocation3], %s278
          %s280 = smul.u32 64, %s26
          %s282 = ssub.s32 4096, 4096
          %283 = vsyncadd %s276, %s282
          %s284 = smul.addr %s280, 64
          %s285 = scalar_lea.hbm %s1, %s284
          %s286 = sshll.u32 %s279, 4
          %s287 = int_to_ptr.vmem [resolvable:$true] %s286
          %292 = dma.hbm_to_vmem [thread:$0]  %s285, 4096, %s287, %s276, 64, 64, 4
        $region44: #{tpu_custom_call.1} parent=35 // pred_fallthru
          _
      $region36: #{tpu_custom_call.1} parent=5 // pred_fallthru
        _
      %p293 = scmp.le.s32.totalorder 1, %s18
      %p294 = scmp.lt.s32.totalorder %s18, 7
      %p295 = pnand %p293, %p294
      %p296 = pneg %p295
      // Predicated region
      $region45: #{tpu_custom_call.1} parent=5 // pred_check
        _
      $region46: #{tpu_custom_call.1} parent=5 // pred_check_branch
        %298 = sbr.rel (%p295) target = $region48
      $region47: #{tpu_custom_call.1} parent=5 // pred_region
        %s299 = ssub.s32 %s18, 1
        %s300 = sand.u32 %s71, 1
        %s301 = scalar_lea.sflag [#allocation4], %s300
        %s302 = sand.u32 %s71, 1
        %s303 = smul.addr %s302, 256
        %s304 = scalar_lea.vmem [#allocation3], %s303
        // Predicated region
        $region49: #{tpu_custom_call.1} parent=47 // pred_check
          %p305 = pneg %p84
        $region50: #{tpu_custom_call.1} parent=47 // pred_check_branch
          %307 = sbr.rel (%p305) target = $region52
        $region51: #{tpu_custom_call.1} parent=47 // pred_region
          %308 = dma.done %s301, 4096
        $region52: #{tpu_custom_call.1} parent=47 // pred_fallthru
          _
        // Predicated region
        $region53: #{tpu_custom_call.1} parent=47 // pred_check
          %p309 = pneg %p168
        $region54: #{tpu_custom_call.1} parent=47 // pred_check_branch
          %311 = sbr.rel (%p309) target = $region56
        $region55: #{tpu_custom_call.1} parent=47 // pred_region
          %312 = dma.done [#allocation7], 512
        $region56: #{tpu_custom_call.1} parent=47 // pred_fallthru
          _
        %s313 = smul.u32 4, %s28
        %p314 = scmp.lt.s32.totalorder %s27, 0
        %s315 = scalar_select %p314, %s27, 0
        %p316 = scmp.lt.s32.totalorder %s313, 23
        %s317 = scalar_select %p316, %s313, 23
        %s318 = smul.addr %s315, 24
        %s319 = sadd.s32 %s317, %s318
        %s320 = smul.addr %s319, 4
        %s321 = scalar_lea.vmem %s0, %s320
        %p322 = pneg %p58
        %p323 = pneg %p55
        %s324 = sand.u32 %s71, 1
        %s325 = scalar_lea.sflag [#allocation4], %s324
        %s326 = sand.u32 %s71, 1
        %s327 = smul.addr %s326, 256
        %s328 = scalar_lea.vmem [#allocation3], %s327
        %p329 = pneg %p84
        %p330 = pneg %p81
        %p331 = pneg %p105
        %p332 = pneg %p102
        %p333 = pneg %p126
        %p334 = pneg %p123
        %p335 = pneg %p147
        %p336 = pneg %p144
        %p337 = pneg %p168
        %p338 = pneg %p165
        %p339 = pneg %p189
        %p340 = pneg %p186
        %p341 = pneg %p215
        %p342 = pneg %p212
        %s343 = smul.u32 4, %s28
        %p344 = scmp.lt.s32.totalorder %s27, 0
        %s345 = scalar_select %p344, %s27, 0
        %p346 = scmp.lt.s32.totalorder %s343, 23
        %s347 = scalar_select %p346, %s343, 23
        %s348 = smul.addr %s345, 24
        %s349 = sadd.s32 %s347, %s348
        %s350 = smul.addr %s349, 4
        %s351 = scalar_lea.vmem %s0, %s350
        %s352 = smul.u32 4, %s28
        %s353 = smul.u32 64, %s28
        %p355 = scmp.eq.s32.totalorder %s28, 0
        // Predicated region
        $region57: #{tpu_custom_call.1} parent=47 // pred_check
          %p356 = pneg %p355
        $region58: #{tpu_custom_call.1} parent=47 // pred_check_branch
          %358 = sbr.rel (%p356) target = $region60
        $region59: #{tpu_custom_call.1} parent=47 // pred_region
          %359 = vst [vmem:[#allocation2] sm:$0xff] 0.0
        $region60: #{tpu_custom_call.1} parent=47 // pred_fallthru
          _
        %v360 = vld [vmem:[#allocation2] sm:$0xff]
        %v361 = vld [vmem:[%s351] sm:$0xff]
        %v362 = vld [vmem:[%s351 + $0x8] sm:$0xff]
        %v363 = vld [vmem:[%s304] sm:$0xf]
        %v364 = vld [vmem:[%s304 + $0x4] sm:$0xf]
        %v365 = vld [vmem:[%s304 + $0x8] sm:$0xf]
        %v366 = vld [vmem:[%s304 + $0xc] sm:$0xf]
        %v367 = vld [vmem:[%s304 + $0x10] sm:$0xf]
        %v368 = vld [vmem:[%s304 + $0x14] sm:$0xf]
        %v369 = vld [vmem:[%s304 + $0x18] sm:$0xf]
        %v370 = vld [vmem:[%s304 + $0x1c] sm:$0xf]
        %v371 = vld [vmem:[%s304 + $0x20] sm:$0xf]
        %v372 = vld [vmem:[%s304 + $0x24] sm:$0xf]
        %v373 = vld [vmem:[%s304 + $0x28] sm:$0xf]
        %v374 = vld [vmem:[%s304 + $0x2c] sm:$0xf]
        %v375 = vld [vmem:[%s304 + $0x30] sm:$0xf]
        %v376 = vld [vmem:[%s304 + $0x34] sm:$0xf]
        %v377 = vld [vmem:[%s304 + $0x38] sm:$0xf]
        %v378 = vld [vmem:[%s304 + $0x3c] sm:$0xf]
        %v379 = vld [vmem:[%s304 + $0x40] sm:$0xf]
        %v380 = vld [vmem:[%s304 + $0x44] sm:$0xf]
        %v381 = vld [vmem:[%s304 + $0x48] sm:$0xf]
        %v382 = vld [vmem:[%s304 + $0x4c] sm:$0xf]
        %v383 = vld [vmem:[%s304 + $0x50] sm:$0xf]
        %v384 = vld [vmem:[%s304 + $0x54] sm:$0xf]
        %v385 = vld [vmem:[%s304 + $0x58] sm:$0xf]
        %v386 = vld [vmem:[%s304 + $0x5c] sm:$0xf]
        %v387 = vld [vmem:[%s304 + $0x60] sm:$0xf]
        %v388 = vld [vmem:[%s304 + $0x64] sm:$0xf]
        %v389 = vld [vmem:[%s304 + $0x68] sm:$0xf]
        %v390 = vld [vmem:[%s304 + $0x6c] sm:$0xf]
        %v391 = vld [vmem:[%s304 + $0x70] sm:$0xf]
        %v392 = vld [vmem:[%s304 + $0x74] sm:$0xf]
        %v393 = vld [vmem:[%s304 + $0x78] sm:$0xf]
        %v394 = vld [vmem:[%s304 + $0x7c] sm:$0xf]
        %v395 = vld [vmem:[%s304 + $0x80] sm:$0xf]
        %v396 = vld [vmem:[%s304 + $0x84] sm:$0xf]
        %v397 = vld [vmem:[%s304 + $0x88] sm:$0xf]
        %v398 = vld [vmem:[%s304 + $0x8c] sm:$0xf]
        %v399 = vld [vmem:[%s304 + $0x90] sm:$0xf]
        %v400 = vld [vmem:[%s304 + $0x94] sm:$0xf]
        %v401 = vld [vmem:[%s304 + $0x98] sm:$0xf]
        %v402 = vld [vmem:[%s304 + $0x9c] sm:$0xf]
        %v403 = vld [vmem:[%s304 + $0xa0] sm:$0xf]
        %v404 = vld [vmem:[%s304 + $0xa4] sm:$0xf]
        %v405 = vld [vmem:[%s304 + $0xa8] sm:$0xf]
        %v406 = vld [vmem:[%s304 + $0xac] sm:$0xf]
        %v407 = vld [vmem:[%s304 + $0xb0] sm:$0xf]
        %v408 = vld [vmem:[%s304 + $0xb4] sm:$0xf]
        %v409 = vld [vmem:[%s304 + $0xb8] sm:$0xf]
        %v410 = vld [vmem:[%s304 + $0xbc] sm:$0xf]
        %v411 = vld [vmem:[%s304 + $0xc0] sm:$0xf]
        %v412 = vld [vmem:[%s304 + $0xc4] sm:$0xf]
        %v413 = vld [vmem:[%s304 + $0xc8] sm:$0xf]
        %v414 = vld [vmem:[%s304 + $0xcc] sm:$0xf]
        %v415 = vld [vmem:[%s304 + $0xd0] sm:$0xf]
        %v416 = vld [vmem:[%s304 + $0xd4] sm:$0xf]
        %v417 = vld [vmem:[%s304 + $0xd8] sm:$0xf]
        %v418 = vld [vmem:[%s304 + $0xdc] sm:$0xf]
        %v419 = vld [vmem:[%s304 + $0xe0] sm:$0xf]
        %v420 = vld [vmem:[%s304 + $0xe4] sm:$0xf]
        %v421 = vld [vmem:[%s304 + $0xe8] sm:$0xf]
        %v422 = vld [vmem:[%s304 + $0xec] sm:$0xf]
        %v423 = vld [vmem:[%s304 + $0xf0] sm:$0xf]
        %v424 = vld [vmem:[%s304 + $0xf4] sm:$0xf]
        %v425 = vld [vmem:[%s304 + $0xf8] sm:$0xf]
        %v426 = vld [vmem:[%s304 + $0xfc] sm:$0xf]
        %v429 = vunpack.c.l.b16 %v361
        %v430 = vunpack.c.h.b16 %v361
        %v431 = vunpack.c.l.b16 %v362
        %v432 = vunpack.c.h.b16 %v362
        %v433 = vpack.c.b16 %v429, %v429
        %v434 = vpack.c.b16 %v430, %v430
        %v435 = vpack.c.b16 %v431, %v431
        %v436 = vpack.c.b16 %v432, %v432
        %v505 = vunpack.c.l.b16 %v363
        %v506 = vunpack.c.l.b16 %v364
        %v507 = vunpack.c.l.b16 %v365
        %v508 = vunpack.c.l.b16 %v366
        %v509 = vunpack.c.l.b16 %v367
        %v510 = vunpack.c.l.b16 %v368
        %v511 = vunpack.c.l.b16 %v369
        %v512 = vunpack.c.l.b16 %v370
        %v513 = vunpack.c.l.b16 %v371
        %v514 = vunpack.c.l.b16 %v372
        %v515 = vunpack.c.l.b16 %v373
        %v516 = vunpack.c.l.b16 %v374
        %v517 = vunpack.c.l.b16 %v375
        %v518 = vunpack.c.l.b16 %v376
        %v519 = vunpack.c.l.b16 %v377
        %v520 = vunpack.c.l.b16 %v378
        %v521 = vunpack.c.l.b16 %v379
        %v522 = vunpack.c.l.b16 %v380
        %v523 = vunpack.c.l.b16 %v381
        %v524 = vunpack.c.l.b16 %v382
        %v525 = vunpack.c.l.b16 %v383
        %v526 = vunpack.c.l.b16 %v384
        %v527 = vunpack.c.l.b16 %v385
        %v528 = vunpack.c.l.b16 %v386
        %v529 = vunpack.c.l.b16 %v387
        %v530 = vunpack.c.l.b16 %v388
        %v531 = vunpack.c.l.b16 %v389
        %v532 = vunpack.c.l.b16 %v390
        %v533 = vunpack.c.l.b16 %v391
        %v534 = vunpack.c.l.b16 %v392
        %v535 = vunpack.c.l.b16 %v393
        %v536 = vunpack.c.l.b16 %v394
        %v537 = vunpack.c.l.b16 %v395
        %v538 = vunpack.c.l.b16 %v396
        %v539 = vunpack.c.l.b16 %v397
        %v540 = vunpack.c.l.b16 %v398
        %v541 = vunpack.c.l.b16 %v399
        %v542 = vunpack.c.l.b16 %v400
        %v543 = vunpack.c.l.b16 %v401
        %v544 = vunpack.c.l.b16 %v402
        %v545 = vunpack.c.l.b16 %v403
        %v546 = vunpack.c.l.b16 %v404
        %v547 = vunpack.c.l.b16 %v405
        %v548 = vunpack.c.l.b16 %v406
        %v549 = vunpack.c.l.b16 %v407
        %v550 = vunpack.c.l.b16 %v408
        %v551 = vunpack.c.l.b16 %v409
        %v552 = vunpack.c.l.b16 %v410
        %v553 = vunpack.c.l.b16 %v411
        %v554 = vunpack.c.l.b16 %v412
        %v555 = vunpack.c.l.b16 %v413
        %v556 = vunpack.c.l.b16 %v414
        %v557 = vunpack.c.l.b16 %v415
        %v558 = vunpack.c.l.b16 %v416
        %v559 = vunpack.c.l.b16 %v417
        %v560 = vunpack.c.l.b16 %v418
        %v561 = vunpack.c.l.b16 %v419
        %v562 = vunpack.c.l.b16 %v420
        %v563 = vunpack.c.l.b16 %v421
        %v564 = vunpack.c.l.b16 %v422
        %v565 = vunpack.c.l.b16 %v423
        %v566 = vunpack.c.l.b16 %v424
        %v567 = vunpack.c.l.b16 %v425
        %v568 = vunpack.c.l.b16 %v426
        %v569 = vpack.c.b16 %v506, %v505
        %v570 = vpack.c.b16 %v508, %v507
        %v571 = vpack.c.b16 %v510, %v509
        %v572 = vpack.c.b16 %v512, %v511
        %v573 = vpack.c.b16 %v514, %v513
        %v574 = vpack.c.b16 %v516, %v515
        %v575 = vpack.c.b16 %v518, %v517
        %v576 = vpack.c.b16 %v520, %v519
        %v577 = vpack.c.b16 %v522, %v521
        %v578 = vpack.c.b16 %v524, %v523
        %v579 = vpack.c.b16 %v526, %v525
        %v580 = vpack.c.b16 %v528, %v527
        %v581 = vpack.c.b16 %v530, %v529
        %v582 = vpack.c.b16 %v532, %v531
        %v583 = vpack.c.b16 %v534, %v533
        %v584 = vpack.c.b16 %v536, %v535
        %v585 = vpack.c.b16 %v538, %v537
        %v586 = vpack.c.b16 %v540, %v539
        %v587 = vpack.c.b16 %v542, %v541
        %v588 = vpack.c.b16 %v544, %v543
        %v589 = vpack.c.b16 %v546, %v545
        %v590 = vpack.c.b16 %v548, %v547
        %v591 = vpack.c.b16 %v550, %v549
        %v592 = vpack.c.b16 %v552, %v551
        %v593 = vpack.c.b16 %v554, %v553
        %v594 = vpack.c.b16 %v556, %v555
        %v595 = vpack.c.b16 %v558, %v557
        %v596 = vpack.c.b16 %v560, %v559
        %v597 = vpack.c.b16 %v562, %v561
        %v598 = vpack.c.b16 %v564, %v563
        %v599 = vpack.c.b16 %v566, %v565
        %v600 = vpack.c.b16 %v568, %v567
        %633 = vmatprep.subr.bf16.mxu0 0
        %634 = vmatpush1.bf16.msra.mxu0 %v569
        %635 = vmatprep.subr.bf16.mxu0 0
        %636 = vmatpush1.bf16.msra.mxu0 %v570
        %637 = vmatprep.subr.bf16.mxu0 0
        %638 = vmatpush1.bf16.msra.mxu0 %v571
        %639 = vmatprep.subr.bf16.mxu0 0
        %640 = vmatpush1.bf16.msra.mxu0 %v572
        %641 = vmatprep.subr.bf16.mxu0 0
        %642 = vmatpush1.bf16.msra.mxu0 %v573
        %643 = vmatprep.subr.bf16.mxu0 0
        %644 = vmatpush1.bf16.msra.mxu0 %v574
        %645 = vmatprep.subr.bf16.mxu0 0
        %646 = vmatpush1.bf16.msra.mxu0 %v575
        %647 = vmatprep.subr.bf16.mxu0 0
        %648 = vmatpush1.bf16.msra.mxu0 %v576
        %649 = vmatprep.subr.bf16.mxu0 0
        %650 = vmatpush1.bf16.msra.mxu0 %v577
        %651 = vmatprep.subr.bf16.mxu0 0
        %652 = vmatpush1.bf16.msra.mxu0 %v578
        %653 = vmatprep.subr.bf16.mxu0 0
        %654 = vmatpush1.bf16.msra.mxu0 %v579
        %655 = vmatprep.subr.bf16.mxu0 0
        %656 = vmatpush1.bf16.msra.mxu0 %v580
        %657 = vmatprep.subr.bf16.mxu0 0
        %658 = vmatpush1.bf16.msra.mxu0 %v581
        %659 = vmatprep.subr.bf16.mxu0 0
        %660 = vmatpush1.bf16.msra.mxu0 %v582
        %661 = vmatprep.subr.bf16.mxu0 0
        %662 = vmatpush1.bf16.msra.mxu0 %v583
        %663 = vmatprep.subr.bf16.mxu0 0
        %664 = vmatpush1.bf16.msra.mxu0 %v584
        %665 = vmatprep.mubr.bf16.mxu0 %v434
        %666 = vmatmul.mubr.bf16.gmra.mrb[0].mxu0 %v433
        %v667 = vpop.f32.mrb[0].mxu0
        %v668 = vadd.f32 0.0, %v667
        %v669 = vpop.f32.mrb[0].mxu0
        %v670 = vpop.f32.mrb[0].mxu0
        %v671 = vpop.f32.mrb[0].mxu0
        %672 = vdwg.mxu0
        %673 = vmatprep.subr.bf16.mxu0 0
        %674 = vmatpush1.bf16.msra.mxu0 %v585
        %675 = vmatprep.subr.bf16.mxu0 0
        %676 = vmatpush1.bf16.msra.mxu0 %v586
        %677 = vmatprep.subr.bf16.mxu0 0
        %678 = vmatpush1.bf16.msra.mxu0 %v587
        %679 = vmatprep.subr.bf16.mxu0 0
        %680 = vmatpush1.bf16.msra.mxu0 %v588
        %681 = vmatprep.subr.bf16.mxu0 0
        %682 = vmatpush1.bf16.msra.mxu0 %v589
        %683 = vmatprep.subr.bf16.mxu0 0
        %684 = vmatpush1.bf16.msra.mxu0 %v590
        %685 = vmatprep.subr.bf16.mxu0 0
        %686 = vmatpush1.bf16.msra.mxu0 %v591
        %687 = vmatprep.subr.bf16.mxu0 0
        %688 = vmatpush1.bf16.msra.mxu0 %v592
        %689 = vmatprep.subr.bf16.mxu0 0
        %690 = vmatpush1.bf16.msra.mxu0 %v593
        %691 = vmatprep.subr.bf16.mxu0 0
        %692 = vmatpush1.bf16.msra.mxu0 %v594
        %693 = vmatprep.subr.bf16.mxu0 0
        %694 = vmatpush1.bf16.msra.mxu0 %v595
        %695 = vmatprep.subr.bf16.mxu0 0
        %696 = vmatpush1.bf16.msra.mxu0 %v596
        %697 = vmatprep.subr.bf16.mxu0 0
        %698 = vmatpush1.bf16.msra.mxu0 %v597
        %699 = vmatprep.subr.bf16.mxu0 0
        %700 = vmatpush1.bf16.msra.mxu0 %v598
        %701 = vmatprep.subr.bf16.mxu0 0
        %702 = vmatpush1.bf16.msra.mxu0 %v599
        %703 = vmatprep.subr.bf16.mxu0 0
        %704 = vmatpush1.bf16.msra.mxu0 %v600
        %705 = vmatprep.mubr.bf16.mxu0 %v436
        %706 = vmatmul.mubr.bf16.gmra.mrb[0].mxu0 %v435
        %v707 = vpop.f32.mrb[0].mxu0
        %v708 = vadd.f32 %v668, %v707
        %v709 = vpop.f32.mrb[0].mxu0
        %v710 = vpop.f32.mrb[0].mxu0
        %v711 = vpop.f32.mrb[0].mxu0
        %712 = vdwg.mxu0
        %v713 = vadd.f32 %v360, %v708
        %714 = vst [vmem:[#allocation2] sm:$0xff] %v713
        %p715 = scmp.eq.s32.totalorder %s28, 5
        // Predicated region
        $region61: #{tpu_custom_call.1} parent=47 // pred_check
          %p716 = pneg %p715
        $region62: #{tpu_custom_call.1} parent=47 // pred_check_branch
          %718 = sbr.rel (%p716) target = $region64
        $region63: #{tpu_custom_call.1} parent=47 // pred_region
          %v719 = vld [vmem:[#allocation2] sm:$0xff]
          %v720 = vld [vmem:[%s2] sm:$0x1]
          %v722 = vlaneseq
          %v723 = vshrl.u32 %v722, 7
          %v724 = vsub.s32 0, %v723
          %v725 = vrot.slane %v720, %v724
          %v727 = vadd.f32 %v719, %v725
          %v728 = vmax.f32 %v727, 0.0
          %v729 = vpack.c.bf16 %v728, %v728
          %v730 = vld [vmem:[%s3] sm:$0xf]
          %v731 = vld [vmem:[%s3 + $0x4] sm:$0xf]
          %v732 = vld [vmem:[%s3 + $0x8] sm:$0xf]
          %v733 = vld [vmem:[%s3 + $0xc] sm:$0xf]
          %v734 = vld [vmem:[%s3 + $0x10] sm:$0xf]
          %v735 = vld [vmem:[%s3 + $0x14] sm:$0xf]
          %v736 = vld [vmem:[%s3 + $0x18] sm:$0xf]
          %v737 = vld [vmem:[%s3 + $0x1c] sm:$0xf]
          %v738 = vld [vmem:[%s3 + $0x20] sm:$0xf]
          %v739 = vld [vmem:[%s3 + $0x24] sm:$0xf]
          %v740 = vld [vmem:[%s3 + $0x28] sm:$0xf]
          %v741 = vld [vmem:[%s3 + $0x2c] sm:$0xf]
          %v742 = vld [vmem:[%s3 + $0x30] sm:$0xf]
          %v743 = vld [vmem:[%s3 + $0x34] sm:$0xf]
          %v744 = vld [vmem:[%s3 + $0x38] sm:$0xf]
          %v745 = vld [vmem:[%s3 + $0x3c] sm:$0xf]
          %v746 = vld [vmem:[%s4] sm:$0x1]
          %v748 = vlaneseq
          %v749 = vshrl.u32 %v748, 7
          %v750 = vsub.s32 0, %v749
          %v751 = vrot.slane %v746, %v750
          %v769 = vunpack.c.l.b16 %v730
          %v770 = vunpack.c.l.b16 %v731
          %v771 = vunpack.c.l.b16 %v732
          %v772 = vunpack.c.l.b16 %v733
          %v773 = vunpack.c.l.b16 %v734
          %v774 = vunpack.c.l.b16 %v735
          %v775 = vunpack.c.l.b16 %v736
          %v776 = vunpack.c.l.b16 %v737
          %v777 = vunpack.c.l.b16 %v738
          %v778 = vunpack.c.l.b16 %v739
          %v779 = vunpack.c.l.b16 %v740
          %v780 = vunpack.c.l.b16 %v741
          %v781 = vunpack.c.l.b16 %v742
          %v782 = vunpack.c.l.b16 %v743
          %v783 = vunpack.c.l.b16 %v744
          %v784 = vunpack.c.l.b16 %v745
          %v785 = vpack.c.b16 %v770, %v769
          %v786 = vpack.c.b16 %v772, %v771
          %v787 = vpack.c.b16 %v774, %v773
          %v788 = vpack.c.b16 %v776, %v775
          %v789 = vpack.c.b16 %v778, %v777
          %v790 = vpack.c.b16 %v780, %v779
          %v791 = vpack.c.b16 %v782, %v781
          %v792 = vpack.c.b16 %v784, %v783
          %801 = vmatprep.subr.bf16.mxu0 0
          %802 = vmatpush1.bf16.msra.mxu0 %v785
          %803 = vmatprep.subr.bf16.mxu0 0
          %804 = vmatpush1.bf16.msra.mxu0 %v786
          %805 = vmatprep.subr.bf16.mxu0 0
          %806 = vmatpush1.bf16.msra.mxu0 %v787
          %807 = vmatprep.subr.bf16.mxu0 0
          %808 = vmatpush1.bf16.msra.mxu0 %v788
          %809 = vmatprep.subr.bf16.mxu0 0
          %810 = vmatpush1.bf16.msra.mxu0 %v789
          %811 = vmatprep.subr.bf16.mxu0 0
          %812 = vmatpush1.bf16.msra.mxu0 %v790
          %813 = vmatprep.subr.bf16.mxu0 0
          %814 = vmatpush1.bf16.msra.mxu0 %v791
          %815 = vmatprep.subr.bf16.mxu0 0
          %816 = vmatpush1.bf16.msra.mxu0 %v792
          %817 = vmatprep.subr.bf16.mxu0 0
          %818 = vmatpush1.bf16.msra.mxu0 0
          %819 = vmatprep.subr.bf16.mxu0 0
          %820 = vmatpush1.bf16.msra.mxu0 0
          %821 = vmatprep.subr.bf16.mxu0 0
          %822 = vmatpush1.bf16.msra.mxu0 0
          %823 = vmatprep.subr.bf16.mxu0 0
          %824 = vmatpush1.bf16.msra.mxu0 0
          %825 = vmatprep.subr.bf16.mxu0 0
          %826 = vmatpush1.bf16.msra.mxu0 0
          %827 = vmatprep.subr.bf16.mxu0 0
          %828 = vmatpush1.bf16.msra.mxu0 0
          %829 = vmatprep.subr.bf16.mxu0 0
          %830 = vmatpush1.bf16.msra.mxu0 0
          %831 = vmatprep.subr.bf16.mxu0 0
          %832 = vmatpush1.bf16.msra.mxu0 0
          %833 = vmatprep.mubr.bf16.mxu0 0
          %834 = vmatmul.mubr.bf16.gmra.mrb[0].mxu0 %v729
          %v835 = vpop.f32.mrb[0].mxu0
          %v836 = vadd.f32 %v751, %v835
          %v837 = vpop.f32.mrb[0].mxu0
          %v838 = vpop.f32.mrb[0].mxu0
          %v839 = vpop.f32.mrb[0].mxu0
          %840 = vdwg.mxu0
          %v841 = vmax.f32 %v836, 0.0
          %v842 = vpack.c.bf16 %v841, %v841
          %v843 = vld [vmem:[#allocation6] sm:$0xf]
          %v844 = vld [vmem:[#allocation6 + $0x4] sm:$0xf]
          %v845 = vld [vmem:[#allocation6 + $0x8] sm:$0xf]
          %v846 = vld [vmem:[#allocation6 + $0xc] sm:$0xf]
          %v847 = vld [vmem:[#allocation6 + $0x10] sm:$0xf]
          %v848 = vld [vmem:[#allocation6 + $0x14] sm:$0xf]
          %v849 = vld [vmem:[#allocation6 + $0x18] sm:$0xf]
          %v850 = vld [vmem:[#allocation6 + $0x1c] sm:$0xf]
          %v851 = vld [vmem:[%s6] sm:$0x1]
          %v853 = vlaneseq
          %v854 = vshrl.u32 %v853, 7
          %v855 = vsub.s32 0, %v854
          %v856 = vrot.slane %v851, %v855
          %v866 = vunpack.c.l.b16 %v843
          %v867 = vunpack.c.l.b16 %v844
          %v868 = vunpack.c.l.b16 %v845
          %v869 = vunpack.c.l.b16 %v846
          %v870 = vunpack.c.l.b16 %v847
          %v871 = vunpack.c.l.b16 %v848
          %v872 = vunpack.c.l.b16 %v849
          %v873 = vunpack.c.l.b16 %v850
          %v874 = vpack.c.b16 %v867, %v866
          %v875 = vpack.c.b16 %v869, %v868
          %v876 = vpack.c.b16 %v871, %v870
          %v877 = vpack.c.b16 %v873, %v872
          %vm882 = vcmask 523264
          %v884 = vsel %vm882, %v842, 0
          %886 = vmatprep.subr.bf16.mxu0 0
          %887 = vmatpush1.bf16.msra.mxu0 %v874
          %888 = vmatprep.subr.bf16.mxu0 0
          %889 = vmatpush1.bf16.msra.mxu0 %v875
          %890 = vmatprep.subr.bf16.mxu0 0
          %891 = vmatpush1.bf16.msra.mxu0 %v876
          %892 = vmatprep.subr.bf16.mxu0 0
          %893 = vmatpush1.bf16.msra.mxu0 %v877
          %894 = vmatprep.subr.bf16.mxu0 0
          %895 = vmatpush1.bf16.msra.mxu0 0
          %896 = vmatprep.subr.bf16.mxu0 0
          %897 = vmatpush1.bf16.msra.mxu0 0
          %898 = vmatprep.subr.bf16.mxu0 0
          %899 = vmatpush1.bf16.msra.mxu0 0
          %900 = vmatprep.subr.bf16.mxu0 0
          %901 = vmatpush1.bf16.msra.mxu0 0
          %902 = vmatprep.subr.bf16.mxu0 0
          %903 = vmatpush1.bf16.msra.mxu0 0
          %904 = vmatprep.subr.bf16.mxu0 0
          %905 = vmatpush1.bf16.msra.mxu0 0
          %906 = vmatprep.subr.bf16.mxu0 0
          %907 = vmatpush1.bf16.msra.mxu0 0
          %908 = vmatprep.subr.bf16.mxu0 0
          %909 = vmatpush1.bf16.msra.mxu0 0
          %910 = vmatprep.subr.bf16.mxu0 0
          %911 = vmatpush1.bf16.msra.mxu0 0
          %912 = vmatprep.subr.bf16.mxu0 0
          %913 = vmatpush1.bf16.msra.mxu0 0
          %914 = vmatprep.subr.bf16.mxu0 0
          %915 = vmatpush1.bf16.msra.mxu0 0
          %916 = vmatprep.subr.bf16.mxu0 0
          %917 = vmatpush1.bf16.msra.mxu0 0
          %918 = vmatprep.mubr.bf16.mxu0 0
          %919 = vmatmul.mubr.bf16.gmra.mrb[0].mxu0 %v884
          %v920 = vpop.f32.mrb[0].mxu0
          %v921 = vadd.f32 %v856, %v920
          %v922 = vpop.f32.mrb[0].mxu0
          %v923 = vpop.f32.mrb[0].mxu0
          %v924 = vpop.f32.mrb[0].mxu0
          %925 = vdwg.mxu0
          %926 = vst [vmem:[#allocation8] sm:$0xff] %v921
        $region64: #{tpu_custom_call.1} parent=47 // pred_fallthru
          _
        // Predicated region
        $region65: #{tpu_custom_call.1} parent=47 // pred_check
          %p927 = pneg %p212
        $region66: #{tpu_custom_call.1} parent=47 // pred_check_branch
          %929 = sbr.rel (%p927) target = $region68
        $region67: #{tpu_custom_call.1} parent=47 // pred_region
          %s931 = ssub.s32 128, 128
          %932 = vsyncadd [#allocation5], %s931
          %s933 = smul.addr %s27, 128
          %s934 = scalar_lea.hbm %s7, %s933
          %s936 = sshll.u32 [#allocation8], 4
          %s937 = int_to_ptr.vmem [resolvable:$true] %s936
          %939 = dma.vmem_to_hbm [thread:$0]  %s937, 128, %s934, [#allocation5]
        $region68: #{tpu_custom_call.1} parent=47 // pred_fallthru
          _
        // Predicated region
        $region69: #{tpu_custom_call.1} parent=47 // pred_check
          %p940 = pneg %p212
        $region70: #{tpu_custom_call.1} parent=47 // pred_check_branch
          %942 = sbr.rel (%p940) target = $region72
        $region71: #{tpu_custom_call.1} parent=47 // pred_region
          %943 = dma.done [#allocation5], 128
        $region72: #{tpu_custom_call.1} parent=47 // pred_fallthru
          _
      $region48: #{tpu_custom_call.1} parent=5 // pred_fallthru
        _
      %p944 = scmp.le.s32.totalorder 2, %s18
      // Predicated region
      $region73: #{tpu_custom_call.1} parent=5 // pred_check
        %p945 = pneg %p944
      $region74: #{tpu_custom_call.1} parent=5 // pred_check_branch
        %947 = sbr.rel (%p945) target = $region76
      $region75: #{tpu_custom_call.1} parent=5 // pred_region
        %s948 = ssub.s32 %s18, 2
      $region76: #{tpu_custom_call.1} parent=5 // pred_fallthru
        _
    $region6: #{tpu_custom_call.1} parent=1 // loop_footer
      %s22 = sadd.s32 1, %s18
    $region7: #{tpu_custom_call.1} parent=1 // loop_footer_branch
      %17 = sbr.rel target = $region3
    $region8: #{tpu_custom_call.1} parent=1 // loop_exit
      _
    %949 = vsyncpa [#allocation4], 1
    %s950 = scalar_lea.sflag [#allocation4], 1
    %951 = vsyncpa %s950, 1
    %952 = vsyncpa [#allocation7], 1
    %953 = vsyncpa [#allocation5], 1
    %s954 = scalar_lea.sflag [#allocation5], 1
    %955 = vsyncpa %s954, 1

</llo_original>
